<compile_context>
chip_gen: v5e
topology: v5e:2x2
jax: 0.10.0
libtpu: 0.0.40
codegen_flags: <defaults>
</compile_context>

<pallas_src>
import functools

import jax
import jax.numpy as jnp
from jax.experimental import pallas as pl
from jax.experimental.pallas import tpu as pltpu


def _round_up(x, m):
    return ((x + m - 1) // m) * m


@functools.lru_cache(maxsize=1)
def _vmem_budget_bytes():
    """~85% of this chip's VMEM capacity (fallback 64 MiB: safe on v7x too)."""
    cap = 64 * 1024 * 1024
    try:
        cap = int(pltpu.get_tpu_info().vmem_capacity_bytes)
    except Exception:
        pass
    return int(cap * 0.85)


def _pad2d(a, rows, cols):
    """Zero-pad a 2-D array; no-op (no copy) when already the right shape."""
    r, c = a.shape
    if r == rows and c == cols:
        return a
    return jnp.zeros((rows, cols), a.dtype).at[:r, :c].set(a)


# --------------------------- kernels ---------------------------------------


def _ffn_resident_kernel(x_ref, w1_ref, b1_ref, w2_ref, b2_ref, o_ref):
    # Whole FFN for one token tile; weights/biases are VMEM-resident
    # (constant block index) across the token grid.
    h = jnp.dot(x_ref[...], w1_ref[...], preferred_element_type=jnp.float32)
    h = jnp.maximum(h + b1_ref[...].astype(jnp.float32), 0.0)          # ReLU
    out = jnp.dot(h.astype(w2_ref.dtype), w2_ref[...],
                  preferred_element_type=jnp.float32)
    o_ref[...] = (out + b2_ref[...].astype(jnp.float32)).astype(o_ref.dtype)


def _ffn_chunked_inplace_kernel(x_ref, w1_ref, b1_ref, w2_ref, b2_ref, o_ref):
    # f32 output: accumulate straight into o_ref, which is VMEM-resident
    # across the d_inner (reduction) axis -- no scratch, no finalize pass.
    n = pl.program_id(1)
    h = jnp.dot(x_ref[...], w1_ref[...], preferred_element_type=jnp.float32)
    h = jnp.maximum(h + b1_ref[...].astype(jnp.float32), 0.0)
    contrib = jnp.dot(h.astype(w2_ref.dtype), w2_ref[...],
                      preferred_element_type=jnp.float32)

    @pl.when(n == 0)
    def _():
        # b2 added exactly once, on the first reduction step.
        o_ref[...] = contrib + b2_ref[...].astype(jnp.float32)

    @pl.when(n != 0)
    def _():
        o_ref[...] = o_ref[...] + contrib


def _ffn_chunked_scratch_kernel(x_ref, w1_ref, b1_ref, w2_ref, b2_ref, o_ref,
                                acc_ref):
    # Low-precision output: accumulate in an f32 scratch, cast once at the end.
    n = pl.program_id(1)

    @pl.when(n == 0)
    def _():
        acc_ref[...] = jnp.zeros_like(acc_ref)

    h = jnp.dot(x_ref[...], w1_ref[...], preferred_element_type=jnp.float32)
    h = jnp.maximum(h + b1_ref[...].astype(jnp.float32), 0.0)
    acc_ref[...] += jnp.dot(h.astype(w2_ref.dtype), w2_ref[...],
                            preferred_element_type=jnp.float32)

    @pl.when(n == pl.num_programs(1) - 1)
    def _():
        o_ref[...] = (acc_ref[...]
                      + b2_ref[...].astype(jnp.float32)).astype(o_ref.dtype)


# --------------------------- wrapper ----------------------------------------


@functools.partial(jax.jit, static_argnames=("tm", "tn", "path"))
def ffn_pallas(x, w1, b1, w2, b2, *, tm=512, tn=512, path=None):
    """FFN forward. x: (..., d_model); w1: (d_model, d_inner); b1: (d_inner,);
    w2: (d_inner, d_model); b2: (d_model,).  `path` forces a strategy
    ("resident" / "chunked") for testing; default is auto-selected."""
    orig_shape = x.shape
    d_model = orig_shape[-1]
    d_inner = w1.shape[1]
    dtype = x.dtype
    it = jnp.dtype(dtype).itemsize

    x2 = x.reshape(-1, d_model)
    m = x2.shape[0]

    # Lane-dense padding targets (last dims multiples of 128).
    dmp = _round_up(d_model, 128)
    dip = _round_up(d_inner, 128)
    budget = _vmem_budget_bytes()

    # Token-tile cap: user cap, problem size, and (when there are enough rows)
    # at most half the rows so grid[0] >= 2 and both v7x TensorCores get work.
    tm_cap = min(int(tm), _round_up(m, 8))
    if m >= 16:
        tm_cap = min(tm_cap, _round_up(-(-m // 2), 8))
    tm_cap = max(8, tm_cap)

    bias_bytes = 4 * (dip + dmp) * it            # generous (double-buffered)
    w_bytes = 2 * dmp * dip * it                 # W1 + W2, single copy
    w_alloc = 2 * w_bytes                        # allow for double-buffering

    resident = (w_alloc <= (2 * budget) // 3) if path is None \
        else (path == "resident")

    tm_fit = 8
    if resident:
        # Per-token-row VMEM: x + out tiles (double-buffered) + f32 hidden and
        # f32 pre-cast output intermediates.
        per_row = 2 * dmp * it + 2 * dmp * it + 4 * dip + 4 * dmp
        tm_fit = max(budget - w_alloc - bias_bytes, 0) // per_row // 8 * 8
        if tm_fit < 8:
            if path == "resident":
                tm_fit = 8
            else:
                resident = False

    if resident:
        tm_eff = int(min(tm_cap, tm_fit))
        mp = _round_up(m, tm_eff)
        grid = (mp // tm_eff,)

        x_p = _pad2d(x2, mp, dmp)
        w1_p = _pad2d(w1, dmp, dip)
        b1_p = _pad2d(b1.reshape(1, -1), 1, dip)
        w2_p = _pad2d(w2, dip, dmp)
        b2_p = _pad2d(b2.reshape(1, -1), 1, dmp)

        in_specs = [
            pl.BlockSpec((tm_eff, dmp), lambda i: (i, 0)),   # x tile
            pl.BlockSpec((dmp, dip), lambda i: (0, 0)),      # W1 (resident)
            pl.BlockSpec((1, dip), lambda i: (0, 0)),        # b1 (resident)
            pl.BlockSpec((dip, dmp), lambda i: (0, 0)),      # W2 (resident)
            pl.BlockSpec((1, dmp), lambda i: (0, 0)),        # b2 (resident)
        ]
        out_spec = pl.BlockSpec((tm_eff, dmp), lambda i: (i, 0))
        kernel = _ffn_resident_kernel
        scratch = []
        dim_sem = ("parallel",)
        weight_reads = 1
        dip_eff = dip
    else:
        needs_scratch = dtype != jnp.float32
        tn_eff = min(_round_up(max(int(tn), 128), 128), dip)
        while True:
            fixed = (2 * dmp * tn_eff * it          # W1 chunk (double-buffered)
                     + 2 * tn_eff * dmp * it        # W2 chunk (double-buffered)
                     + 4 * (tn_eff + dmp) * it)     # bias chunks
            per_row = (2 * dmp * it + 2 * dmp * it  # x + out tiles
                       + 4 * tn_eff + 4 * dmp       # f32 hidden chunk + contrib
                       + (4 * dmp if needs_scratch else 0))
            tm_fit = max(budget - fixed, 0) // per_row // 8 * 8
            if tm_fit >= 8 or tn_eff <= 128:
                break
            tn_eff = max(128, tn_eff // 2)
        tm_eff = int(max(8, min(tm_cap, tm_fit)))
        dip_eff = _round_up(dip, tn_eff)
        mp = _round_up(m, tm_eff)
        grid = (mp // tm_eff, dip_eff // tn_eff)

        x_p = _pad2d(x2, mp, dmp)
        w1_p = _pad2d(w1, dmp, dip_eff)
        b1_p = _pad2d(b1.reshape(1, -1), 1, dip_eff)
        w2_p = _pad2d(w2, dip_eff, dmp)
        b2_p = _pad2d(b2.reshape(1, -1), 1, dmp)

        in_specs = [
            pl.BlockSpec((tm_eff, dmp), lambda i, n: (i, 0)),   # x tile
            pl.BlockSpec((dmp, tn_eff), lambda i, n: (0, n)),   # W1 chunk
            pl.BlockSpec((1, tn_eff), lambda i, n: (0, n)),     # b1 chunk
            pl.BlockSpec((tn_eff, dmp), lambda i, n: (n, 0)),   # W2 chunk
            pl.BlockSpec((1, dmp), lambda i, n: (0, 0)),        # b2
        ]
        out_spec = pl.BlockSpec((tm_eff, dmp), lambda i, n: (i, 0))
        if needs_scratch:
            kernel = _ffn_chunked_scratch_kernel
            scratch = [pltpu.VMEM((tm_eff, dmp), jnp.float32)]
        else:
            kernel = _ffn_chunked_inplace_kernel
            scratch = []
        dim_sem = ("parallel", "arbitrary")
        weight_reads = grid[0]

    # Advisory cost estimate (weights counted once per M tile on the chunked
    # path, once total on the resident path).
    flops = 4 * mp * dmp * dip_eff
    bytes_accessed = it * (2 * mp * dmp
                           + weight_reads * 2 * dmp * dip_eff
                           + dip_eff + dmp)
    cost = pl.CostEstimate(flops=int(flops), transcendentals=0,
                           bytes_accessed=int(bytes_accessed))

    out = pl.pallas_call(
        kernel,
        out_shape=jax.ShapeDtypeStruct((mp, dmp), dtype),
        grid_spec=pltpu.PrefetchScalarGridSpec(
            num_scalar_prefetch=0,
            grid=grid,
            in_specs=in_specs,
            out_specs=out_spec,
            scratch_shapes=scratch,
        ),
        compiler_params=pltpu.CompilerParams(
            dimension_semantics=dim_sem,
            vmem_limit_bytes=int(budget)),
        cost_estimate=cost,
    )(x_p, w1_p, b1_p, w2_p, b2_p)

    # Strip padding and restore leading dims.
    return out[:m, :d_model].reshape(orig_shape)


def init_ffn_params(key, d_model, d_inner, dtype=jnp.float32):
    """Deterministic init matching nn.Linear shapes (W: (out, in), b: (out,))."""
    k1, k2, k3, k4 = jax.random.split(key, 4)
    bound1 = 1.0 / (d_model ** 0.5)
    bound2 = 1.0 / (d_inner ** 0.5)
    w1_pt = jax.random.uniform(k1, (d_inner, d_model), dtype, -bound1, bound1)
    b1 = jax.random.uniform(k2, (d_inner,), dtype, -bound1, bound1)
    w2_pt = jax.random.uniform(k3, (d_model, d_inner), dtype, -bound2, bound2)
    b2 = jax.random.uniform(k4, (d_model,), dtype, -bound2, bound2)
    # Transpose to (in, out) for the kernel's x @ W convention (glue only).
    return w1_pt.T, b1, w2_pt.T, b2


if __name__ == "__main__":
    d_model, d_inner = 32, 64
    batch, seq = 2, 8

    key = jax.random.PRNGKey(0)
    kx, kp = jax.random.split(key)
    x = jax.random.normal(kx, (batch, seq, d_model), jnp.float32)
    w1, b1, w2, b2 = init_ffn_params(kp, d_model, d_inner)

    # 1) Default path (weights-resident), f32.
    out = jax.block_until_ready(ffn_pallas(x, w1, b1, w2, b2))
    ref = jnp.maximum(x @ w1 + b1, 0.0) @ w2 + b2
    assert out.shape == (batch, seq, d_model)
    assert jnp.allclose(out, ref, atol=1e-5, rtol=1e-5)

    # 2) Chunked-reduction fallback (forced), f32, multi-chunk d_inner
    #    (exercises direct accumulation into o_ref).
    d_inner2 = 256
    w1b, b1b, w2b, b2b = init_ffn_params(jax.random.PRNGKey(1), d_model, d_inner2)
    out2 = jax.block_until_ready(
        ffn_pallas(x, w1b, b1b, w2b, b2b, tn=128, path="chunked"))
    ref2 = jnp.maximum(x @ w1b + b1b, 0.0) @ w2b + b2b
    assert jnp.allclose(out2, ref2, atol=1e-4, rtol=1e-4)

    # 3) Chunked fallback with bf16 output (f32 scratch-accumulator variant).
    f32 = lambda a: a.astype(jnp.float32)
    xb = x.astype(jnp.bfloat16)
    w1c, b1c = w1b.astype(jnp.bfloat16), b1b.astype(jnp.bfloat16)
    w2c, b2c = w2b.astype(jnp.bfloat16), b2b.astype(jnp.bfloat16)
    out3 = jax.block_until_ready(
        ffn_pallas(xb, w1c, b1c, w2c, b2c, tn=128, path="chunked"))
    ref3 = jnp.maximum(f32(xb) @ f32(w1c) + f32(b1c), 0.0) @ f32(w2c) + f32(b2c)
    assert out3.dtype == jnp.bfloat16
    assert jnp.allclose(f32(out3), ref3, atol=3e-2, rtol=3e-2)

    print("KERNEL_OK")
</pallas_src>

<mosaic_0001>
module attributes {stable_mosaic.version = 11 : i64} {
  func.func @_ffn_resident_kernel(%arg0: i32, %arg1: memref<8x128xf32, #tpu.memory_space<vmem>>, %arg2: memref<128x128xf32, #tpu.memory_space<vmem>>, %arg3: memref<1x128xf32, #tpu.memory_space<vmem>>, %arg4: memref<128x128xf32, #tpu.memory_space<vmem>>, %arg5: memref<1x128xf32, #tpu.memory_space<vmem>>, %arg6: memref<8x128xf32, #tpu.memory_space<vmem>>) attributes {dimension_semantics = [#tpu.dimension_semantics<parallel>], iteration_bounds = array<i64: 2>, scalar_prefetch = 0 : i64, scratch_operands = 0 : i64, tpu.core_type = #tpu.core_type<tc>, window_params = [{transform_indices = @transform_0, window_bounds = array<i64: 8, 128>}, {pipeline_mode = #tpu.pipeline_mode<synchronous>, transform_indices = @transform_1, window_bounds = array<i64: 128, 128>}, {pipeline_mode = #tpu.pipeline_mode<synchronous>, transform_indices = @transform_2, window_bounds = array<i64: 1, 128>}, {pipeline_mode = #tpu.pipeline_mode<synchronous>, transform_indices = @transform_3, window_bounds = array<i64: 128, 128>}, {pipeline_mode = #tpu.pipeline_mode<synchronous>, transform_indices = @transform_4, window_bounds = array<i64: 1, 128>}, {transform_indices = @transform_5, window_bounds = array<i64: 8, 128>}]} {
    %c0 = arith.constant 0 : index
    %c0_0 = arith.constant 0 : index
    %0 = vector.load %arg1[%c0, %c0_0] : memref<8x128xf32, #tpu.memory_space<vmem>>, vector<8x128xf32>
    %c0_1 = arith.constant 0 : index
    %c0_2 = arith.constant 0 : index
    %1 = vector.load %arg2[%c0_1, %c0_2] : memref<128x128xf32, #tpu.memory_space<vmem>>, vector<128x128xf32>
    %cst = arith.constant dense<0.000000e+00> : vector<8x128xf32>
    %2 = tpu.matmul %0, %1, %cst {dimension_numbers = #tpu.dot_dimension_numbers<[1], [0], [0], [1], [0, 0, 1, 1], [], []>} : vector<8x128xf32>, vector<128x128xf32>, vector<8x128xf32> -> vector<8x128xf32>
    %c0_3 = arith.constant 0 : index
    %c0_4 = arith.constant 0 : index
    %3 = vector.load %arg3[%c0_3, %c0_4] : memref<1x128xf32, #tpu.memory_space<vmem>>, vector<1x128xf32>
    %4 = vector.broadcast %3 : vector<1x128xf32> to vector<8x128xf32>
    %5 = arith.addf %2, %4 : vector<8x128xf32>
    %cst_5 = arith.constant 0.000000e+00 : f32
    %6 = vector.broadcast %cst_5 : f32 to vector<8x128xf32>
    %7 = arith.maximumf %5, %6 : vector<8x128xf32>
    %c0_6 = arith.constant 0 : index
    %c0_7 = arith.constant 0 : index
    %8 = vector.load %arg4[%c0_6, %c0_7] : memref<128x128xf32, #tpu.memory_space<vmem>>, vector<128x128xf32>
    %cst_8 = arith.constant dense<0.000000e+00> : vector<8x128xf32>
    %9 = tpu.matmul %7, %8, %cst_8 {dimension_numbers = #tpu.dot_dimension_numbers<[1], [0], [0], [1], [0, 0, 1, 1], [], []>} : vector<8x128xf32>, vector<128x128xf32>, vector<8x128xf32> -> vector<8x128xf32>
    %c0_9 = arith.constant 0 : index
    %c0_10 = arith.constant 0 : index
    %10 = vector.load %arg5[%c0_9, %c0_10] : memref<1x128xf32, #tpu.memory_space<vmem>>, vector<1x128xf32>
    %11 = vector.broadcast %10 : vector<1x128xf32> to vector<8x128xf32>
    %12 = arith.addf %9, %11 : vector<8x128xf32>
    %c0_11 = arith.constant 0 : index
    %c0_12 = arith.constant 0 : index
    %13 = vector.load %arg6[%c0_11, %c0_12] : memref<8x128xf32, #tpu.memory_space<vmem>>, vector<8x128xf32>
    tpu.vector_store %arg6[%c0_11, %c0_12], %12 {strides = array<i32>} : memref<8x128xf32, #tpu.memory_space<vmem>>, vector<8x128xf32>,
    return
  }
  func.func @transform_0(%arg0: i32) -> (i32, i32) {
    %c0_i32 = arith.constant 0 : i32
    %c0_i32_0 = arith.constant 0 : i32
    return %arg0, %c0_i32 : i32, i32
  }
  func.func @transform_1(%arg0: i32) -> (i32, i32) {
    %c0_i32 = arith.constant 0 : i32
    %c0_i32_0 = arith.constant 0 : i32
    %c0_i32_1 = arith.constant 0 : i32
    return %c0_i32, %c0_i32_0 : i32, i32
  }
  func.func @transform_2(%arg0: i32) -> (i32, i32) {
    %c0_i32 = arith.constant 0 : i32
    %c0_i32_0 = arith.constant 0 : i32
    %c0_i32_1 = arith.constant 0 : i32
    return %c0_i32, %c0_i32_0 : i32, i32
  }
  func.func @transform_3(%arg0: i32) -> (i32, i32) {
    %c0_i32 = arith.constant 0 : i32
    %c0_i32_0 = arith.constant 0 : i32
    %c0_i32_1 = arith.constant 0 : i32
    return %c0_i32, %c0_i32_0 : i32, i32
  }
  func.func @transform_4(%arg0: i32) -> (i32, i32) {
    %c0_i32 = arith.constant 0 : i32
    %c0_i32_0 = arith.constant 0 : i32
    %c0_i32_1 = arith.constant 0 : i32
    return %c0_i32, %c0_i32_0 : i32, i32
  }
  func.func @transform_5(%arg0: i32) -> (i32, i32) {
    %c0_i32 = arith.constant 0 : i32
    %c0_i32_0 = arith.constant 0 : i32
    return %arg0, %c0_i32 : i32, i32
  }
}

</mosaic_0001>

<llo_original>
// kernel: ffn_pallas.1
$region0: #{ffn_pallas.1}
  #allocation0 [shape = 'u32[]', space=smem, size = 0x4, offset = 0x4, fixed_abs, tag = 'smem constant byte address 0x4 - core index']
  #allocation1 [shape = 'u32[72,128]{1,0:T(1,128)}', space=vmem, size = 0x9000, scoped, tag = 'internal scratch']
  %s0 = inlined_call_operand.vmem [shape: f32[16,128], index: 0, kind: input, shape index: {}]
  %s1 = inlined_call_operand.vmem [shape: f32[128,128], index: 1, kind: input, shape index: {}]
  %s2 = inlined_call_operand.vmem [shape: f32[1,128], index: 2, kind: input, shape index: {}]
  %s3 = inlined_call_operand.vmem [shape: f32[128,128], index: 3, kind: input, shape index: {}]
  %s4 = inlined_call_operand.vmem [shape: f32[1,128], index: 4, kind: input, shape index: {}]
  %s5 = inlined_call_operand.vmem [shape: f32[16,128], index: 5, kind: output, shape index: {}]
  %s6 = sld [smem:[#allocation0]]
  $region53: #{ffn_pallas.1} parent=0
    _
  %s8 = ssub.s32 1, %s6
  %s9 = scalar_select 0, %s8, %s6
  loop: start=0, step=1, limit=4
  $region2: #{ffn_pallas.1} parent=0 // loop_pre_header
    _
  $region3: #{ffn_pallas.1} parent=0 // loop_header
    %s11 = sphi 0, %s15
    %p12 = scmp.ge.s32.totalorder %s11, 4
    %s21 = sphi 0, %s23
    %s24 = sphi 0, %s21
    %s25 = sphi 0, %s24
    %s41 = sphi 0, %s25
    %s45 = sphi 0, %s45
    %s47 = sphi 0, %s45
    %s48 = sphi 0, %s47
    %s62 = sphi 0, %s48
    %s66 = sphi 0, %s66
    %s68 = sphi 0, %s66
    %s69 = sphi 0, %s68
    %s83 = sphi 0, %s69
    %s87 = sphi 0, %s87
    %s89 = sphi 0, %s87
    %s90 = sphi 0, %s89
    %s104 = sphi 0, %s90
    %s108 = sphi 0, %s108
    %s110 = sphi 0, %s108
    %s111 = sphi 0, %s110
    %s125 = sphi 0, %s111
    %s131 = sphi 0, %s133
    %s134 = sphi 0, %s131
    %s135 = sphi 0, %s134
    %s151 = sphi 0, %s135
  $region4: #{ffn_pallas.1} parent=0 // loop_header_branch
    %14 = sbr.rel (%p12) target = $region8
  $region5: #{ffn_pallas.1} parent=0 // loop_body
    %s16 = ssub.s32 %s11, 1
    %s17 = ssub.s32 %s11, 2
    %s18 = sadd.s32 %s11, 1
    %s19 = ssub.s32 %s11, %s18
    %p20 = scmp.eq.s32.totalorder %s19, 0
    %s22 = sadd.s32 %s21, 1
    %s23 = scalar_select %p20, %s21, %s22
    %p26 = pneg %p20
    %p27 = scmp.eq.s32.totalorder %s11, 1
    %p28 = por %p26, %p27
    %p29 = scmp.ne.s32.totalorder %s21, %s24
    %p30 = scmp.eq.s32.totalorder %s11, 0
    %p31 = por %p29, %p30
    %p32 = scmp.ne.s32.totalorder %s21, %s24
    %p33 = scmp.eq.s32.totalorder %s16, 1
    %p34 = por %p32, %p33
    %p35 = scmp.ne.s32.totalorder %s24, %s25
    %p36 = scmp.eq.s32.totalorder %s16, 0
    %p37 = por %p35, %p36
    %p38 = scmp.ne.s32.totalorder %s24, %s25
    %p39 = scmp.eq.s32.totalorder %s17, 1
    %p40 = por %p38, %p39
    %p42 = scmp.ne.s32.totalorder %s25, %s41
    %p43 = scmp.eq.s32.totalorder %s17, 0
    %p44 = por %p42, %p43
    %s46 = sadd.s32 %s45, 1
    %p49 = scmp.eq.s32.totalorder %s11, 1
    %p50 = scmp.ne.s32.totalorder %s45, %s47
    %p51 = scmp.eq.s32.totalorder %s11, 0
    %p52 = por %p50, %p51
    %p53 = scmp.ne.s32.totalorder %s45, %s47
    %p54 = scmp.eq.s32.totalorder %s16, 1
    %p55 = por %p53, %p54
    %p56 = scmp.ne.s32.totalorder %s47, %s48
    %p57 = scmp.eq.s32.totalorder %s16, 0
    %p58 = por %p56, %p57
    %p59 = scmp.ne.s32.totalorder %s47, %s48
    %p60 = scmp.eq.s32.totalorder %s17, 1
    %p61 = por %p59, %p60
    %p63 = scmp.ne.s32.totalorder %s48, %s62
    %p64 = scmp.eq.s32.totalorder %s17, 0
    %p65 = por %p63, %p64
    %s67 = sadd.s32 %s66, 1
    %p70 = scmp.eq.s32.totalorder %s11, 1
    %p71 = scmp.ne.s32.totalorder %s66, %s68
    %p72 = scmp.eq.s32.totalorder %s11, 0
    %p73 = por %p71, %p72
    %p74 = scmp.ne.s32.totalorder %s66, %s68
    %p75 = scmp.eq.s32.totalorder %s16, 1
    %p76 = por %p74, %p75
    %p77 = scmp.ne.s32.totalorder %s68, %s69
    %p78 = scmp.eq.s32.totalorder %s16, 0
    %p79 = por %p77, %p78
    %p80 = scmp.ne.s32.totalorder %s68, %s69
    %p81 = scmp.eq.s32.totalorder %s17, 1
    %p82 = por %p80, %p81
    %p84 = scmp.ne.s32.totalorder %s69, %s83
    %p85 = scmp.eq.s32.totalorder %s17, 0
    %p86 = por %p84, %p85
    %s88 = sadd.s32 %s87, 1
    %p91 = scmp.eq.s32.totalorder %s11, 1
    %p92 = scmp.ne.s32.totalorder %s87, %s89
    %p93 = scmp.eq.s32.totalorder %s11, 0
    %p94 = por %p92, %p93
    %p95 = scmp.ne.s32.totalorder %s87, %s89
    %p96 = scmp.eq.s32.totalorder %s16, 1
    %p97 = por %p95, %p96
    %p98 = scmp.ne.s32.totalorder %s89, %s90
    %p99 = scmp.eq.s32.totalorder %s16, 0
    %p100 = por %p98, %p99
    %p101 = scmp.ne.s32.totalorder %s89, %s90
    %p102 = scmp.eq.s32.totalorder %s17, 1
    %p103 = por %p101, %p102
    %p105 = scmp.ne.s32.totalorder %s90, %s104
    %p106 = scmp.eq.s32.totalorder %s17, 0
    %p107 = por %p105, %p106
    %s109 = sadd.s32 %s108, 1
    %p112 = scmp.eq.s32.totalorder %s11, 1
    %p113 = scmp.ne.s32.totalorder %s108, %s110
    %p114 = scmp.eq.s32.totalorder %s11, 0
    %p115 = por %p113, %p114
    %p116 = scmp.ne.s32.totalorder %s108, %s110
    %p117 = scmp.eq.s32.totalorder %s16, 1
    %p118 = por %p116, %p117
    %p119 = scmp.ne.s32.totalorder %s110, %s111
    %p120 = scmp.eq.s32.totalorder %s16, 0
    %p121 = por %p119, %p120
    %p122 = scmp.ne.s32.totalorder %s110, %s111
    %p123 = scmp.eq.s32.totalorder %s17, 1
    %p124 = por %p122, %p123
    %p126 = scmp.ne.s32.totalorder %s111, %s125
    %p127 = scmp.eq.s32.totalorder %s17, 0
    %p128 = por %p126, %p127
    %s129 = ssub.s32 %s11, %s18
    %p130 = scmp.eq.s32.totalorder %s129, 0
    %s132 = sadd.s32 %s131, 1
    %s133 = scalar_select %p130, %s131, %s132
    %p136 = pneg %p130
    %p137 = scmp.eq.s32.totalorder %s11, 1
    %p138 = por %p136, %p137
    %p139 = scmp.ne.s32.totalorder %s131, %s134
    %p140 = scmp.eq.s32.totalorder %s11, 0
    %p141 = por %p139, %p140
    %p142 = scmp.ne.s32.totalorder %s131, %s134
    %p143 = scmp.eq.s32.totalorder %s16, 1
    %p144 = por %p142, %p143
    %p145 = scmp.ne.s32.totalorder %s134, %s135
    %p146 = scmp.eq.s32.totalorder %s16, 0
    %p147 = por %p145, %p146
    %p148 = scmp.ne.s32.totalorder %s134, %s135
    %p149 = scmp.eq.s32.totalorder %s17, 1
    %p150 = por %p148, %p149
    %p152 = scmp.ne.s32.totalorder %s135, %s151
    %p153 = scmp.eq.s32.totalorder %s17, 0
    %p154 = por %p152, %p153
    %p155 = scmp.le.s32.totalorder 1, %s11
    %p156 = scmp.lt.s32.totalorder %s11, 3
    %p157 = pnand %p155, %p156
    %p158 = pneg %p157
    // Predicated region
    $region9: #{ffn_pallas.1} parent=5 // pred_check
      _
    $region10: #{ffn_pallas.1} parent=5 // pred_check_branch
      %160 = sbr.rel (%p157) target = $region12
    $region11: #{ffn_pallas.1} parent=5 // pred_region
      %s161 = ssub.s32 %s11, 1
      // Predicated region
      $region13: #{ffn_pallas.1} parent=11 // pred_check
        %p162 = pneg %p58
      $region14: #{ffn_pallas.1} parent=11 // pred_check_branch
        %164 = sbr.rel (%p162) target = $region16
      $region15: #{ffn_pallas.1} parent=11 // pred_region
        _
      $region16: #{ffn_pallas.1} parent=11 // pred_fallthru
        _
      // Predicated region
      $region17: #{ffn_pallas.1} parent=11 // pred_check
        %p165 = pneg %p79
      $region18: #{ffn_pallas.1} parent=11 // pred_check_branch
        %167 = sbr.rel (%p165) target = $region20
      $region19: #{ffn_pallas.1} parent=11 // pred_region
        _
      $region20: #{ffn_pallas.1} parent=11 // pred_fallthru
        _
      // Predicated region
      $region21: #{ffn_pallas.1} parent=11 // pred_check
        %p168 = pneg %p100
      $region22: #{ffn_pallas.1} parent=11 // pred_check_branch
        %170 = sbr.rel (%p168) target = $region24
      $region23: #{ffn_pallas.1} parent=11 // pred_region
        _
      $region24: #{ffn_pallas.1} parent=11 // pred_fallthru
        _
      // Predicated region
      $region25: #{ffn_pallas.1} parent=11 // pred_check
        %p171 = pneg %p121
      $region26: #{ffn_pallas.1} parent=11 // pred_check_branch
        %173 = sbr.rel (%p171) target = $region28
      $region27: #{ffn_pallas.1} parent=11 // pred_region
        _
      $region28: #{ffn_pallas.1} parent=11 // pred_fallthru
        _
    $region12: #{ffn_pallas.1} parent=5 // pred_fallthru
      _
    %p174 = scmp.lt.s32.totalorder %s11, 2
    // Predicated region
    $region29: #{ffn_pallas.1} parent=5 // pred_check
      %p175 = pneg %p174
    $region30: #{ffn_pallas.1} parent=5 // pred_check_branch
      %177 = sbr.rel (%p175) target = $region32
    $region31: #{ffn_pallas.1} parent=5 // pred_region
      // Predicated region
      $region33: #{ffn_pallas.1} parent=31 // pred_check
        %p178 = pneg %p31
      $region34: #{ffn_pallas.1} parent=31 // pred_check_branch
        %180 = sbr.rel (%p178) target = $region36
      $region35: #{ffn_pallas.1} parent=31 // pred_region
        %p181 = scmp.lt.s32.totalorder %s11, 1
        %s182 = scalar_select %p181, %s11, 1
        %s183 = smul.addr %s182, 8
        %s184 = scalar_lea.vmem %s0, %s183
      $region36: #{ffn_pallas.1} parent=31 // pred_fallthru
        _
    $region32: #{ffn_pallas.1} parent=5 // pred_fallthru
      _
    %p185 = scmp.le.s32.totalorder 1, %s11
    %p186 = scmp.lt.s32.totalorder %s11, 3
    %p187 = pnand %p185, %p186
    %p188 = pneg %p187
    // Predicated region
    $region37: #{ffn_pallas.1} parent=5 // pred_check
      _
    $region38: #{ffn_pallas.1} parent=5 // pred_check_branch
      %190 = sbr.rel (%p187) target = $region40
    $region39: #{ffn_pallas.1} parent=5 // pred_region
      %s191 = ssub.s32 %s11, 1
      %p192 = scmp.lt.s32.totalorder %s16, 1
      %s193 = scalar_select %p192, %s16, 1
      %s194 = smul.addr %s193, 8
      %s195 = scalar_lea.vmem %s0, %s194
      %p196 = pneg %p37
      %p197 = pneg %p34
      %p198 = pneg %p58
      %p199 = pneg %p55
      %p200 = pneg %p79
      %p201 = pneg %p76
      %p202 = pneg %p100
      %p203 = pneg %p97
      %p204 = pneg %p121
      %p205 = pneg %p118
      %p206 = pneg %p147
      %p207 = pneg %p144
      %p208 = scmp.lt.s32.totalorder %s16, 1
      %s209 = scalar_select %p208, %s16, 1
      %s210 = smul.addr %s209, 8
      %s211 = scalar_lea.vmem %s5, %s210
      %p212 = scmp.lt.s32.totalorder %s16, 1
      %s213 = scalar_select %p212, %s16, 1
      %s214 = smul.addr %s213, 8
      %s215 = scalar_lea.vmem %s0, %s214
      %p216 = scmp.lt.s32.totalorder %s16, 1
      %s217 = scalar_select %p216, %s16, 1
      %s218 = smul.addr %s217, 8
      %s219 = scalar_lea.vmem %s5, %s218
      %v220 = vld [vmem:[%s215] sm:$0xff]
      %v221 = vld [vmem:[%s1] sm:$0xff]
      %v222 = vld [vmem:[%s1 + $0x8] sm:$0xff]
      %v223 = vld [vmem:[%s1 + $0x10] sm:$0xff]
      %v224 = vld [vmem:[%s1 + $0x18] sm:$0xff]
      %v225 = vld [vmem:[%s1 + $0x20] sm:$0xff]
      %v226 = vld [vmem:[%s1 + $0x28] sm:$0xff]
      %v227 = vld [vmem:[%s1 + $0x30] sm:$0xff]
      %v228 = vld [vmem:[%s1 + $0x38] sm:$0xff]
      %v229 = vld [vmem:[%s1 + $0x40] sm:$0xff]
      %v230 = vld [vmem:[%s1 + $0x48] sm:$0xff]
      %v231 = vld [vmem:[%s1 + $0x50] sm:$0xff]
      %v232 = vld [vmem:[%s1 + $0x58] sm:$0xff]
      %v233 = vld [vmem:[%s1 + $0x60] sm:$0xff]
      %v234 = vld [vmem:[%s1 + $0x68] sm:$0xff]
      %v235 = vld [vmem:[%s1 + $0x70] sm:$0xff]
      %v236 = vld [vmem:[%s1 + $0x78] sm:$0xff]
      %v237 = vld [vmem:[%s2] sm:$0x1]
      %v239 = vperm.slane %v237, 0
      %241 = vmatpush.msra.mxu0 %v236
      %242 = vmatpush.msra.mxu0 %v235
      %243 = vmatpush.msra.mxu0 %v234
      %244 = vmatpush.msra.mxu0 %v233
      %245 = vmatpush.msra.mxu0 %v232
      %246 = vmatpush.msra.mxu0 %v231
      %247 = vmatpush.msra.mxu0 %v230
      %248 = vmatpush.msra.mxu0 %v229
      %249 = vmatpush.msra.mxu0 %v228
      %250 = vmatpush.msra.mxu0 %v227
      %251 = vmatpush.msra.mxu0 %v226
      %252 = vmatpush.msra.mxu0 %v225
      %253 = vmatpush.msra.mxu0 %v224
      %254 = vmatpush.msra.mxu0 %v223
      %255 = vmatpush.msra.mxu0 %v222
      %256 = vmatpush.msra.mxu0 %v221
      %257 = vmatmul.f32.gmra.mxu0 %v220
      %v258 = vpop.f32.mrf.mxu0
      %v259 = vadd.f32 %v239, %v258
      %260 = vdwg.mxu0
      %v261 = vmax.f32 %v259, 0.0
      %v262 = vld [vmem:[%s3] sm:$0xff]
      %v263 = vld [vmem:[%s3 + $0x8] sm:$0xff]
      %v264 = vld [vmem:[%s3 + $0x10] sm:$0xff]
      %v265 = vld [vmem:[%s3 + $0x18] sm:$0xff]
      %v266 = vld [vmem:[%s3 + $0x20] sm:$0xff]
      %v267 = vld [vmem:[%s3 + $0x28] sm:$0xff]
      %v268 = vld [vmem:[%s3 + $0x30] sm:$0xff]
      %v269 = vld [vmem:[%s3 + $0x38] sm:$0xff]
      %v270 = vld [vmem:[%s3 + $0x40] sm:$0xff]
      %v271 = vld [vmem:[%s3 + $0x48] sm:$0xff]
      %v272 = vld [vmem:[%s3 + $0x50] sm:$0xff]
      %v273 = vld [vmem:[%s3 + $0x58] sm:$0xff]
      %v274 = vld [vmem:[%s3 + $0x60] sm:$0xff]
      %v275 = vld [vmem:[%s3 + $0x68] sm:$0xff]
      %v276 = vld [vmem:[%s3 + $0x70] sm:$0xff]
      %v277 = vld [vmem:[%s3 + $0x78] sm:$0xff]
      %v278 = vld [vmem:[%s4] sm:$0x1]
      %v280 = vperm.slane %v278, 0
      %282 = vmatpush.msra.mxu0 %v277
      %283 = vmatpush.msra.mxu0 %v276
      %284 = vmatpush.msra.mxu0 %v275
      %285 = vmatpush.msra.mxu0 %v274
      %286 = vmatpush.msra.mxu0 %v273
      %287 = vmatpush.msra.mxu0 %v272
      %288 = vmatpush.msra.mxu0 %v271
      %289 = vmatpush.msra.mxu0 %v270
      %290 = vmatpush.msra.mxu0 %v269
      %291 = vmatpush.msra.mxu0 %v268
      %292 = vmatpush.msra.mxu0 %v267
      %293 = vmatpush.msra.mxu0 %v266
      %294 = vmatpush.msra.mxu0 %v265
      %295 = vmatpush.msra.mxu0 %v264
      %296 = vmatpush.msra.mxu0 %v263
      %297 = vmatpush.msra.mxu0 %v262
      %298 = vmatmul.f32.gmra.mxu0 %v261
      %v299 = vpop.f32.mrf.mxu0
      %v300 = vadd.f32 %v280, %v299
      %301 = vdwg.mxu0
      %302 = vst [vmem:[%s219] sm:$0xff] %v300
      %p303 = scmp.lt.s32.totalorder %s16, 1
      %s304 = scalar_select %p303, %s16, 1
      %s305 = smul.addr %s304, 8
      %s306 = scalar_lea.vmem %s5, %s305
      // Predicated region
      $region41: #{ffn_pallas.1} parent=39 // pred_check
        %p307 = pneg %p144
      $region42: #{ffn_pallas.1} parent=39 // pred_check_branch
        %309 = sbr.rel (%p307) target = $region44
      $region43: #{ffn_pallas.1} parent=39 // pred_region
        _
      $region44: #{ffn_pallas.1} parent=39 // pred_fallthru
        _
    $region40: #{ffn_pallas.1} parent=5 // pred_fallthru
      _
    %p310 = scmp.le.s32.totalorder 2, %s11
    // Predicated region
    $region45: #{ffn_pallas.1} parent=5 // pred_check
      %p311 = pneg %p310
    $region46: #{ffn_pallas.1} parent=5 // pred_check_branch
      %313 = sbr.rel (%p311) target = $region48
    $region47: #{ffn_pallas.1} parent=5 // pred_region
      %s314 = ssub.s32 %s11, 2
      // Predicated region
      $region49: #{ffn_pallas.1} parent=47 // pred_check
        %p315 = pneg %p150
      $region50: #{ffn_pallas.1} parent=47 // pred_check_branch
        %317 = sbr.rel (%p315) target = $region52
      $region51: #{ffn_pallas.1} parent=47 // pred_region
        %p318 = scmp.lt.s32.totalorder %s17, 1
        %s319 = scalar_select %p318, %s17, 1
        %s320 = smul.addr %s319, 8
        %s321 = scalar_lea.vmem %s5, %s320
      $region52: #{ffn_pallas.1} parent=47 // pred_fallthru
        _
    $region48: #{ffn_pallas.1} parent=5 // pred_fallthru
      _
  $region6: #{ffn_pallas.1} parent=0 // loop_footer
    %s15 = sadd.s32 1, %s11
  $region7: #{ffn_pallas.1} parent=0 // loop_footer_branch
    %10 = sbr.rel target = $region3
  $region8: #{ffn_pallas.1} parent=0 // loop_exit
    _

</llo_original>
